<compile_context>
chip_gen: v5e
topology: v5e:2x2
jax: 0.10.0
libtpu: 0.0.40
codegen_flags: <defaults>
</compile_context>

<pallas_src>
import functools
import math

import jax
import jax.numpy as jnp
from jax.experimental import pallas as pl
from jax.experimental.pallas import tpu as pltpu


# ------------------------------- Pallas kernel -------------------------------

def _wavenet_kernel(x_ref, w_init_ref, wfg_ref, wrs_ref, w1_ref, w2_ref, o_ref,
                    *, dilations, kernel_size, cdil, cres):
    """Entire WaveNet forward for one batch element, resident in VMEM.

    Layout: channels on sublanes, time on lanes.

    x_ref:      (Cin,  Lp)                     bf16
    w_init_ref: (Cres, Cin)                    bf16
    wfg_ref:    (nl, 2*Cdil, K*Cres)           bf16  (filter|gate rows, tap-k col blocks)
    wrs_ref:    (nl, Cres+Cskip, Cdil)         bf16  (residual|skip rows)
    w1_ref:     (Cend, Cskip)                  bf16
    w2_ref:     (Cout, Cend)                   bf16
    o_ref:      (Cout, Lp)                     f32   (only the last l_out lanes are valid)
    """
    f32, bf16 = jnp.float32, jnp.bfloat16

    # initial 1x1 conv: (Cres, Cin) @ (Cin, Lp) -> (Cres, Lp), time lane-dense
    h = jnp.dot(w_init_ref[...], x_ref[...], preferred_element_type=f32)

    skip_sum = None
    for layer, d in enumerate(dilations):                          # unrolled (static)
        # Right-aligned causal dilated conv: output at lane t uses h at lanes
        # t-(K-1)*d ... t.  Tap k (PyTorch weight index k) reads a copy of h
        # delayed by (K-1-k)*d samples, realized as an XLU lane rotation.
        # Lanes t < receptive-offset are garbage (wrapped / padded) but are
        # never read by any valid output position and are sliced off later.
        taps = []
        for k in range(kernel_size):
            s = (kernel_size - 1 - k) * d
            taps.append(pltpu.roll(h, shift=s, axis=1) if s else h)
        # Concatenate along sublanes (f32 tile-aligned: Cres multiple of 8),
        # then one cast -> fused-tap bf16 operand (K*Cres, Lp).
        h_cat = jnp.concatenate(taps, axis=0).astype(bf16)

        # fused filter+gate, all taps in ONE matmul: (2Cdil, K*Cres)@(K*Cres, Lp)
        fg = jnp.dot(wfg_ref[layer], h_cat, preferred_element_type=f32)

        # gated activation in f32 (v5e-safe); splits are sublane-tile aligned
        z = jnp.tanh(fg[:cdil]) * jax.nn.sigmoid(fg[cdil:])        # (Cdil, Lp)

        # fused residual + skip 1x1 conv: (Cres+Cskip, Cdil) @ (Cdil, Lp)
        rs = jnp.dot(wrs_ref[layer], z.astype(bf16), preferred_element_type=f32)

        h = h + rs[:cres]                                          # no slicing/shift needed
        sk = rs[cres:]
        skip_sum = sk if skip_sum is None else skip_sum + sk       # (Cskip, Lp)

    # head: relu -> 1x1 conv -> relu -> 1x1 conv, all lane-dense in time
    hh = jnp.maximum(skip_sum, 0.0).astype(bf16)
    hh = jnp.maximum(jnp.dot(w1_ref[...], hh, preferred_element_type=f32), 0.0)
    o_ref[...] = jnp.dot(w2_ref[...], hh.astype(bf16),
                         preferred_element_type=f32)               # (Cout, Lp)


# --------------------------------- wrapper -----------------------------------

def layer_dilations(cfg):
    return tuple(2 ** i for i in range(cfg['layers'])) * cfg['blocks']


def receptive_field(cfg):
    dilations = [2 ** i for i in range(cfg['layers'])]
    block_field = (cfg['kernel_size'] - 1) * sum(dilations) + 1
    stack_field = cfg['blocks'] * (block_field - 1) + 1
    return stack_field + cfg['initial_filter_width'] - 1


def wavenet_forward(x_ncl, params, cfg):
    """Fused Pallas forward. x_ncl: (N, C_in, L) -> (N, C_out, L_out)."""
    # TODO(synk): initial_filter_width > 1 not implemented (module default is 1).
    assert cfg['initial_filter_width'] == 1

    dilations = layer_dilations(cfg)
    nl = len(dilations)
    ksz = cfg['kernel_size']
    cres, cdil = cfg['residual_channels'], cfg['dilation_channels']
    cskip, cend, cout = (cfg['skip_channels'], cfg['end_channels'],
                         cfg['output_channels'])

    n, cin, l = x_ncl.shape
    l_out = l - receptive_field(cfg) + 1
    assert l_out > 0

    # Lane-dense time axis: pad L up to a multiple of 128 with zeros on the
    # LEFT so valid samples stay right-aligned; the padded prefix merges into
    # the invalid causal prefix and is sliced off after the kernel.
    lp = ((l + 127) // 128) * 128
    bf16 = jnp.bfloat16
    x = jnp.pad(x_ncl, ((0, 0), (0, 0), (lp - l, 0))).astype(bf16)  # (N, Cin, Lp)

    # Pre-pack weights (bf16). filter|gate stacked on output rows, conv taps
    # concatenated along the contraction axis (tap k -> col block k);
    # residual|skip stacked on output rows.
    w_init = params['w_init'][:, :, 0].astype(bf16)                 # (Cres, Cin)
    wfg = jnp.stack([
        jnp.concatenate([
            jnp.concatenate([b['wf'][:, :, k] for k in range(ksz)], axis=1),
            jnp.concatenate([b['wg'][:, :, k] for k in range(ksz)], axis=1),
        ], axis=0)
        for b in params['blocks']
    ]).astype(bf16)                                                 # (nl, 2Cdil, K*Cres)
    wrs = jnp.stack([
        jnp.concatenate([b['wr'][:, :, 0], b['ws'][:, :, 0]], axis=0)
        for b in params['blocks']
    ]).astype(bf16)                                                 # (nl, Cres+Cskip, Cdil)
    w1 = params['w_end1'][:, :, 0].astype(bf16)                     # (Cend, Cskip)
    w2 = params['w_end2'][:, :, 0].astype(bf16)                     # (Cout, Cend)

    kernel = functools.partial(_wavenet_kernel, dilations=dilations,
                               kernel_size=ksz, cdil=cdil, cres=cres)

    out = pl.pallas_call(
        kernel,
        grid=(n,),
        in_specs=[
            pl.BlockSpec((None, cin, lp), lambda i: (i, 0, 0)),
            pl.BlockSpec((cres, cin), lambda i: (0, 0)),
            pl.BlockSpec((nl, 2 * cdil, ksz * cres), lambda i: (0, 0, 0)),
            pl.BlockSpec((nl, cres + cskip, cdil), lambda i: (0, 0, 0)),
            pl.BlockSpec((cend, cskip), lambda i: (0, 0)),
            pl.BlockSpec((cout, cend), lambda i: (0, 0)),
        ],
        out_specs=pl.BlockSpec((None, cout, lp), lambda i: (i, 0, 0)),
        out_shape=jax.ShapeDtypeStruct((n, cout, lp), jnp.float32),
        compiler_params=pltpu.CompilerParams(
            dimension_semantics=("parallel",)),
    )(x, w_init, wfg, wrs, w1, w2)

    # Single aligned slice at the very end: last l_out (valid) time steps.
    return out[:, :, lp - l_out:]                                   # (N, Cout, l_out)


# -------------------------------- parameters ---------------------------------

def make_params(key, cfg):
    # Deterministic init mimicking PyTorch Conv1d weight shapes (Cout, Cin, K).
    def conv_w(k, cout, cin, ksz):
        bound = 1.0 / math.sqrt(cin * ksz)
        return jax.random.uniform(k, (cout, cin, ksz), jnp.float32,
                                  -bound, bound)

    n_layers = cfg['blocks'] * cfg['layers']
    keys = iter(jax.random.split(key, 3 + 4 * n_layers))
    params = {
        'w_init': conv_w(next(keys), cfg['residual_channels'],
                         cfg['input_channels'], cfg['initial_filter_width']),
        'blocks': [],
    }
    for _ in range(n_layers):
        params['blocks'].append(dict(
            wf=conv_w(next(keys), cfg['dilation_channels'],
                      cfg['residual_channels'], cfg['kernel_size']),
            wg=conv_w(next(keys), cfg['dilation_channels'],
                      cfg['residual_channels'], cfg['kernel_size']),
            wr=conv_w(next(keys), cfg['residual_channels'],
                      cfg['dilation_channels'], 1),
            ws=conv_w(next(keys), cfg['skip_channels'],
                      cfg['dilation_channels'], 1),
        ))
    params['w_end1'] = conv_w(next(keys), cfg['end_channels'],
                              cfg['skip_channels'], 1)
    params['w_end2'] = conv_w(next(keys), cfg['output_channels'],
                              cfg['end_channels'], 1)
    return params


# ----------------------------- pure-JAX reference ----------------------------

def _conv1d_ref(x, w, dilation=1, bf16_matmul=False):
    # x: (N, Cin, L), w: (Cout, Cin, K) -- mirrors nn.Conv1d(bias=False)
    ksz = w.shape[2]
    lc = x.shape[2] - dilation * (ksz - 1)
    if bf16_matmul:
        x = x.astype(jnp.bfloat16)
        w = w.astype(jnp.bfloat16)
        precision = None
    else:
        precision = jax.lax.Precision.HIGHEST
    out = jnp.zeros((x.shape[0], w.shape[0], lc), jnp.float32)
    for k in range(ksz):
        out = out + jnp.einsum('oi,nil->nol', w[:, :, k],
                               x[:, :, k * dilation:k * dilation + lc],
                               precision=precision,
                               preferred_element_type=jnp.float32)
    return out


def wavenet_ref(x, params, cfg, bf16_matmul=False):
    dilations = layer_dilations(cfg)
    n, _, l = x.shape
    l_out = l - receptive_field(cfg) + 1
    conv = functools.partial(_conv1d_ref, bf16_matmul=bf16_matmul)
    h = conv(x, params['w_init'])
    skip_sum = jnp.zeros((n, cfg['skip_channels'], l_out), jnp.float32)
    ksz = cfg['kernel_size']
    for blk, d in zip(params['blocks'], dilations):
        f = jnp.tanh(conv(h, blk['wf'], dilation=d))
        g = jax.nn.sigmoid(conv(h, blk['wg'], dilation=d))
        z = f * g
        residual = conv(z, blk['wr'])
        h = h[:, :, d * (ksz - 1):] + residual
        skip_sum = skip_sum + conv(z[:, :, -l_out:], blk['ws'])
    out = jax.nn.relu(skip_sum)
    out = jax.nn.relu(conv(out, params['w_end1']))
    return conv(out, params['w_end2'])


# ----------------------------------- main ------------------------------------

if __name__ == "__main__":
    cfg = dict(layers=3, blocks=2, kernel_size=2, input_channels=8,
               residual_channels=8, dilation_channels=8, skip_channels=16,
               end_channels=16, output_channels=8, initial_filter_width=1,
               bias=False)

    key = jax.random.PRNGKey(0)
    k_x, k_p = jax.random.split(key)
    N, L = 2, 32                               # receptive_field = 15 -> L_out = 18
    x = jax.random.normal(k_x, (N, cfg['input_channels'], L), jnp.float32)
    params = make_params(k_p, cfg)

    fwd = jax.jit(functools.partial(wavenet_forward, cfg=cfg))
    out = jax.block_until_ready(fwd(x, params))

    l_out = L - receptive_field(cfg) + 1
    assert out.shape == (N, cfg['output_channels'], l_out), out.shape

    # Structural check vs. a reference using the SAME bf16-operand / f32-accum
    # matmul semantics as the kernel (tight).
    ref_bf16 = wavenet_ref(x, params, cfg, bf16_matmul=True)
    err_struct = float(jnp.max(jnp.abs(out - ref_bf16)))
    assert err_struct < 1e-2, f"structural mismatch vs bf16 reference: {err_struct}"

    # Numeric-drift check vs. the full-f32 reference (bf16 MXU passes in kernel).
    ref_f32 = wavenet_ref(x, params, cfg, bf16_matmul=False)
    err_f32 = float(jnp.max(jnp.abs(out - ref_f32)))
    assert err_f32 < 5e-2, f"drift vs f32 reference too large: {err_f32}"

    print("KERNEL_OK")
</pallas_src>

<mosaic_0001>
module attributes {stable_mosaic.version = 11 : i64} {
  func.func @_wavenet_kernel(%arg0: i32, %arg1: memref<1x8x128xbf16, #tpu.memory_space<vmem>>, %arg2: memref<8x8xbf16, #tpu.memory_space<vmem>>, %arg3: memref<6x16x16xbf16, #tpu.memory_space<vmem>>, %arg4: memref<6x24x8xbf16, #tpu.memory_space<vmem>>, %arg5: memref<16x16xbf16, #tpu.memory_space<vmem>>, %arg6: memref<8x16xbf16, #tpu.memory_space<vmem>>, %arg7: memref<1x8x128xf32, #tpu.memory_space<vmem>>) attributes {dimension_semantics = [#tpu.dimension_semantics<parallel>], iteration_bounds = array<i64: 2>, scalar_prefetch = 0 : i64, scratch_operands = 0 : i64, tpu.core_type = #tpu.core_type<tc>, window_params = [{transform_indices = @transform_0, window_bounds = array<i64: 1, 8, 128>}, {pipeline_mode = #tpu.pipeline_mode<synchronous>, transform_indices = @transform_1, window_bounds = array<i64: 8, 8>}, {pipeline_mode = #tpu.pipeline_mode<synchronous>, transform_indices = @transform_2, window_bounds = array<i64: 6, 16, 16>}, {pipeline_mode = #tpu.pipeline_mode<synchronous>, transform_indices = @transform_3, window_bounds = array<i64: 6, 24, 8>}, {pipeline_mode = #tpu.pipeline_mode<synchronous>, transform_indices = @transform_4, window_bounds = array<i64: 16, 16>}, {pipeline_mode = #tpu.pipeline_mode<synchronous>, transform_indices = @transform_5, window_bounds = array<i64: 8, 16>}, {transform_indices = @transform_6, window_bounds = array<i64: 1, 8, 128>}]} {
    %c0 = arith.constant 0 : index
    %c0_0 = arith.constant 0 : index
    %0 = vector.load %arg2[%c0, %c0_0] : memref<8x8xbf16, #tpu.memory_space<vmem>>, vector<8x8xbf16>
    %c0_1 = arith.constant 0 : index
    %c0_2 = arith.constant 0 : index
    %c0_3 = arith.constant 0 : index
    %1 = vector.load %arg1[%c0_1, %c0_2, %c0_3] : memref<1x8x128xbf16, #tpu.memory_space<vmem>>, vector<1x8x128xbf16>
    %2 = vector.shape_cast %1 : vector<1x8x128xbf16> to vector<8x128xbf16>
    %cst = arith.constant dense<0.000000e+00> : vector<8x128xf32>
    %3 = tpu.matmul %0, %2, %cst {dimension_numbers = #tpu.dot_dimension_numbers<[1], [0], [0], [1], [0, 0, 1, 1], [], []>} : vector<8x8xbf16>, vector<8x128xbf16>, vector<8x128xf32> -> vector<8x128xf32>
    %c1_i32 = arith.constant 1 : i32
    %4 = tpu.dynamic_rotate %3 by %c1_i32 dim 1 : vector<8x128xf32>, i32 -> vector<8x128xf32>
    %5 = tpu.concatenate %4, %3 in 0 : vector<8x128xf32>, vector<8x128xf32> -> vector<16x128xf32>
    %6 = arith.truncf %5 : vector<16x128xf32> to vector<16x128xbf16>
    %c0_4 = arith.constant 0 : index
    %c0_5 = arith.constant 0 : index
    %c0_6 = arith.constant 0 : index
    %7 = vector.load %arg3[%c0_4, %c0_5, %c0_6] : memref<6x16x16xbf16, #tpu.memory_space<vmem>>, vector<1x16x16xbf16>
    %8 = vector.shape_cast %7 : vector<1x16x16xbf16> to vector<16x16xbf16>
    %cst_7 = arith.constant dense<0.000000e+00> : vector<16x128xf32>
    %9 = tpu.matmul %8, %6, %cst_7 {dimension_numbers = #tpu.dot_dimension_numbers<[1], [0], [0], [1], [0, 0, 1, 1], [], []>} : vector<16x16xbf16>, vector<16x128xbf16>, vector<16x128xf32> -> vector<16x128xf32>
    %10 = vector.extract_strided_slice %9 {offsets = [0, 0], sizes = [8, 128], strides = [1, 1]} : vector<16x128xf32> to vector<8x128xf32>
    %11 = math.tanh %10 : vector<8x128xf32>
    %12 = vector.extract_strided_slice %9 {offsets = [8, 0], sizes = [8, 128], strides = [1, 1]} : vector<16x128xf32> to vector<8x128xf32>
    %13 = arith.negf %12 : vector<8x128xf32>
    %14 = math.exp %13 : vector<8x128xf32>
    %cst_8 = arith.constant 1.000000e+00 : f32
    %15 = vector.broadcast %cst_8 : f32 to vector<8x128xf32>
    %16 = arith.addf %15, %14 : vector<8x128xf32>
    %17 = arith.divf %15, %16 : vector<8x128xf32>
    %18 = arith.mulf %11, %17 : vector<8x128xf32>
    %c0_9 = arith.constant 0 : index
    %c0_10 = arith.constant 0 : index
    %c0_11 = arith.constant 0 : index
    %19 = vector.load %arg4[%c0_9, %c0_10, %c0_11] : memref<6x24x8xbf16, #tpu.memory_space<vmem>>, vector<1x24x8xbf16>
    %20 = vector.shape_cast %19 : vector<1x24x8xbf16> to vector<24x8xbf16>
    %21 = arith.truncf %18 : vector<8x128xf32> to vector<8x128xbf16>
    %cst_12 = arith.constant dense<0.000000e+00> : vector<24x128xf32>
    %22 = tpu.matmul %20, %21, %cst_12 {dimension_numbers = #tpu.dot_dimension_numbers<[1], [0], [0], [1], [0, 0, 1, 1], [], []>} : vector<24x8xbf16>, vector<8x128xbf16>, vector<24x128xf32> -> vector<24x128xf32>
    %23 = vector.extract_strided_slice %22 {offsets = [0, 0], sizes = [8, 128], strides = [1, 1]} : vector<24x128xf32> to vector<8x128xf32>
    %24 = arith.addf %3, %23 : vector<8x128xf32>
    %25 = vector.extract_strided_slice %22 {offsets = [8, 0], sizes = [16, 128], strides = [1, 1]} : vector<24x128xf32> to vector<16x128xf32>
    %c2_i32 = arith.constant 2 : i32
    %26 = tpu.dynamic_rotate %24 by %c2_i32 dim 1 : vector<8x128xf32>, i32 -> vector<8x128xf32>
    %27 = tpu.concatenate %26, %24 in 0 : vector<8x128xf32>, vector<8x128xf32> -> vector<16x128xf32>
    %28 = arith.truncf %27 : vector<16x128xf32> to vector<16x128xbf16>
    %c1 = arith.constant 1 : index
    %c0_13 = arith.constant 0 : index
    %c0_14 = arith.constant 0 : index
    %29 = vector.load %arg3[%c1, %c0_13, %c0_14] : memref<6x16x16xbf16, #tpu.memory_space<vmem>>, vector<1x16x16xbf16>
    %30 = vector.shape_cast %29 : vector<1x16x16xbf16> to vector<16x16xbf16>
    %cst_15 = arith.constant dense<0.000000e+00> : vector<16x128xf32>
    %31 = tpu.matmul %30, %28, %cst_15 {dimension_numbers = #tpu.dot_dimension_numbers<[1], [0], [0], [1], [0, 0, 1, 1], [], []>} : vector<16x16xbf16>, vector<16x128xbf16>, vector<16x128xf32> -> vector<16x128xf32>
    %32 = vector.extract_strided_slice %31 {offsets = [0, 0], sizes = [8, 128], strides = [1, 1]} : vector<16x128xf32> to vector<8x128xf32>
    %33 = math.tanh %32 : vector<8x128xf32>
    %34 = vector.extract_strided_slice %31 {offsets = [8, 0], sizes = [8, 128], strides = [1, 1]} : vector<16x128xf32> to vector<8x128xf32>
    %35 = arith.negf %34 : vector<8x128xf32>
    %36 = math.exp %35 : vector<8x128xf32>
    %cst_16 = arith.constant 1.000000e+00 : f32
    %37 = vector.broadcast %cst_16 : f32 to vector<8x128xf32>
    %38 = arith.addf %37, %36 : vector<8x128xf32>
    %39 = arith.divf %37, %38 : vector<8x128xf32>
    %40 = arith.mulf %33, %39 : vector<8x128xf32>
    %c1_17 = arith.constant 1 : index
    %c0_18 = arith.constant 0 : index
    %c0_19 = arith.constant 0 : index
    %41 = vector.load %arg4[%c1_17, %c0_18, %c0_19] : memref<6x24x8xbf16, #tpu.memory_space<vmem>>, vector<1x24x8xbf16>
    %42 = vector.shape_cast %41 : vector<1x24x8xbf16> to vector<24x8xbf16>
    %43 = arith.truncf %40 : vector<8x128xf32> to vector<8x128xbf16>
    %cst_20 = arith.constant dense<0.000000e+00> : vector<24x128xf32>
    %44 = tpu.matmul %42, %43, %cst_20 {dimension_numbers = #tpu.dot_dimension_numbers<[1], [0], [0], [1], [0, 0, 1, 1], [], []>} : vector<24x8xbf16>, vector<8x128xbf16>, vector<24x128xf32> -> vector<24x128xf32>
    %45 = vector.extract_strided_slice %44 {offsets = [0, 0], sizes = [8, 128], strides = [1, 1]} : vector<24x128xf32> to vector<8x128xf32>
    %46 = arith.addf %24, %45 : vector<8x128xf32>
    %47 = vector.extract_strided_slice %44 {offsets = [8, 0], sizes = [16, 128], strides = [1, 1]} : vector<24x128xf32> to vector<16x128xf32>
    %48 = arith.addf %25, %47 : vector<16x128xf32>
    %c4_i32 = arith.constant 4 : i32
    %49 = tpu.dynamic_rotate %46 by %c4_i32 dim 1 : vector<8x128xf32>, i32 -> vector<8x128xf32>
    %50 = tpu.concatenate %49, %46 in 0 : vector<8x128xf32>, vector<8x128xf32> -> vector<16x128xf32>
    %51 = arith.truncf %50 : vector<16x128xf32> to vector<16x128xbf16>
    %c2 = arith.constant 2 : index
    %c0_21 = arith.constant 0 : index
    %c0_22 = arith.constant 0 : index
    %52 = vector.load %arg3[%c2, %c0_21, %c0_22] : memref<6x16x16xbf16, #tpu.memory_space<vmem>>, vector<1x16x16xbf16>
    %53 = vector.shape_cast %52 : vector<1x16x16xbf16> to vector<16x16xbf16>
    %cst_23 = arith.constant dense<0.000000e+00> : vector<16x128xf32>
    %54 = tpu.matmul %53, %51, %cst_23 {dimension_numbers = #tpu.dot_dimension_numbers<[1], [0], [0], [1], [0, 0, 1, 1], [], []>} : vector<16x16xbf16>, vector<16x128xbf16>, vector<16x128xf32> -> vector<16x128xf32>
    %55 = vector.extract_strided_slice %54 {offsets = [0, 0], sizes = [8, 128], strides = [1, 1]} : vector<16x128xf32> to vector<8x128xf32>
    %56 = math.tanh %55 : vector<8x128xf32>
    %57 = vector.extract_strided_slice %54 {offsets = [8, 0], sizes = [8, 128], strides = [1, 1]} : vector<16x128xf32> to vector<8x128xf32>
    %58 = arith.negf %57 : vector<8x128xf32>
    %59 = math.exp %58 : vector<8x128xf32>
    %cst_24 = arith.constant 1.000000e+00 : f32
    %60 = vector.broadcast %cst_24 : f32 to vector<8x128xf32>
    %61 = arith.addf %60, %59 : vector<8x128xf32>
    %62 = arith.divf %60, %61 : vector<8x128xf32>
    %63 = arith.mulf %56, %62 : vector<8x128xf32>
    %c2_25 = arith.constant 2 : index
    %c0_26 = arith.constant 0 : index
    %c0_27 = arith.constant 0 : index
    %64 = vector.load %arg4[%c2_25, %c0_26, %c0_27] : memref<6x24x8xbf16, #tpu.memory_space<vmem>>, vector<1x24x8xbf16>
    %65 = vector.shape_cast %64 : vector<1x24x8xbf16> to vector<24x8xbf16>
    %66 = arith.truncf %63 : vector<8x128xf32> to vector<8x128xbf16>
    %cst_28 = arith.constant dense<0.000000e+00> : vector<24x128xf32>
    %67 = tpu.matmul %65, %66, %cst_28 {dimension_numbers = #tpu.dot_dimension_numbers<[1], [0], [0], [1], [0, 0, 1, 1], [], []>} : vector<24x8xbf16>, vector<8x128xbf16>, vector<24x128xf32> -> vector<24x128xf32>
    %68 = vector.extract_strided_slice %67 {offsets = [0, 0], sizes = [8, 128], strides = [1, 1]} : vector<24x128xf32> to vector<8x128xf32>
    %69 = arith.addf %46, %68 : vector<8x128xf32>
    %70 = vector.extract_strided_slice %67 {offsets = [8, 0], sizes = [16, 128], strides = [1, 1]} : vector<24x128xf32> to vector<16x128xf32>
    %71 = arith.addf %48, %70 : vector<16x128xf32>
    %c1_i32_29 = arith.constant 1 : i32
    %72 = tpu.dynamic_rotate %69 by %c1_i32_29 dim 1 : vector<8x128xf32>, i32 -> vector<8x128xf32>
    %73 = tpu.concatenate %72, %69 in 0 : vector<8x128xf32>, vector<8x128xf32> -> vector<16x128xf32>
    %74 = arith.truncf %73 : vector<16x128xf32> to vector<16x128xbf16>
    %c3 = arith.constant 3 : index
    %c0_30 = arith.constant 0 : index
    %c0_31 = arith.constant 0 : index
    %75 = vector.load %arg3[%c3, %c0_30, %c0_31] : memref<6x16x16xbf16, #tpu.memory_space<vmem>>, vector<1x16x16xbf16>
    %76 = vector.shape_cast %75 : vector<1x16x16xbf16> to vector<16x16xbf16>
    %cst_32 = arith.constant dense<0.000000e+00> : vector<16x128xf32>
    %77 = tpu.matmul %76, %74, %cst_32 {dimension_numbers = #tpu.dot_dimension_numbers<[1], [0], [0], [1], [0, 0, 1, 1], [], []>} : vector<16x16xbf16>, vector<16x128xbf16>, vector<16x128xf32> -> vector<16x128xf32>
    %78 = vector.extract_strided_slice %77 {offsets = [0, 0], sizes = [8, 128], strides = [1, 1]} : vector<16x128xf32> to vector<8x128xf32>
    %79 = math.tanh %78 : vector<8x128xf32>
    %80 = vector.extract_strided_slice %77 {offsets = [8, 0], sizes = [8, 128], strides = [1, 1]} : vector<16x128xf32> to vector<8x128xf32>
    %81 = arith.negf %80 : vector<8x128xf32>
    %82 = math.exp %81 : vector<8x128xf32>
    %cst_33 = arith.constant 1.000000e+00 : f32
    %83 = vector.broadcast %cst_33 : f32 to vector<8x128xf32>
    %84 = arith.addf %83, %82 : vector<8x128xf32>
    %85 = arith.divf %83, %84 : vector<8x128xf32>
    %86 = arith.mulf %79, %85 : vector<8x128xf32>
    %c3_34 = arith.constant 3 : index
    %c0_35 = arith.constant 0 : index
    %c0_36 = arith.constant 0 : index
    %87 = vector.load %arg4[%c3_34, %c0_35, %c0_36] : memref<6x24x8xbf16, #tpu.memory_space<vmem>>, vector<1x24x8xbf16>
    %88 = vector.shape_cast %87 : vector<1x24x8xbf16> to vector<24x8xbf16>
    %89 = arith.truncf %86 : vector<8x128xf32> to vector<8x128xbf16>
    %cst_37 = arith.constant dense<0.000000e+00> : vector<24x128xf32>
    %90 = tpu.matmul %88, %89, %cst_37 {dimension_numbers = #tpu.dot_dimension_numbers<[1], [0], [0], [1], [0, 0, 1, 1], [], []>} : vector<24x8xbf16>, vector<8x128xbf16>, vector<24x128xf32> -> vector<24x128xf32>
    %91 = vector.extract_strided_slice %90 {offsets = [0, 0], sizes = [8, 128], strides = [1, 1]} : vector<24x128xf32> to vector<8x128xf32>
    %92 = arith.addf %69, %91 : vector<8x128xf32>
    %93 = vector.extract_strided_slice %90 {offsets = [8, 0], sizes = [16, 128], strides = [1, 1]} : vector<24x128xf32> to vector<16x128xf32>
    %94 = arith.addf %71, %93 : vector<16x128xf32>
    %c2_i32_38 = arith.constant 2 : i32
    %95 = tpu.dynamic_rotate %92 by %c2_i32_38 dim 1 : vector<8x128xf32>, i32 -> vector<8x128xf32>
    %96 = tpu.concatenate %95, %92 in 0 : vector<8x128xf32>, vector<8x128xf32> -> vector<16x128xf32>
    %97 = arith.truncf %96 : vector<16x128xf32> to vector<16x128xbf16>
    %c4 = arith.constant 4 : index
    %c0_39 = arith.constant 0 : index
    %c0_40 = arith.constant 0 : index
    %98 = vector.load %arg3[%c4, %c0_39, %c0_40] : memref<6x16x16xbf16, #tpu.memory_space<vmem>>, vector<1x16x16xbf16>
    %99 = vector.shape_cast %98 : vector<1x16x16xbf16> to vector<16x16xbf16>
    %cst_41 = arith.constant dense<0.000000e+00> : vector<16x128xf32>
    %100 = tpu.matmul %99, %97, %cst_41 {dimension_numbers = #tpu.dot_dimension_numbers<[1], [0], [0], [1], [0, 0, 1, 1], [], []>} : vector<16x16xbf16>, vector<16x128xbf16>, vector<16x128xf32> -> vector<16x128xf32>
    %101 = vector.extract_strided_slice %100 {offsets = [0, 0], sizes = [8, 128], strides = [1, 1]} : vector<16x128xf32> to vector<8x128xf32>
    %102 = math.tanh %101 : vector<8x128xf32>
    %103 = vector.extract_strided_slice %100 {offsets = [8, 0], sizes = [8, 128], strides = [1, 1]} : vector<16x128xf32> to vector<8x128xf32>
    %104 = arith.negf %103 : vector<8x128xf32>
    %105 = math.exp %104 : vector<8x128xf32>
    %cst_42 = arith.constant 1.000000e+00 : f32
    %106 = vector.broadcast %cst_42 : f32 to vector<8x128xf32>
    %107 = arith.addf %106, %105 : vector<8x128xf32>
    %108 = arith.divf %106, %107 : vector<8x128xf32>
    %109 = arith.mulf %102, %108 : vector<8x128xf32>
    %c4_43 = arith.constant 4 : index
    %c0_44 = arith.constant 0 : index
    %c0_45 = arith.constant 0 : index
    %110 = vector.load %arg4[%c4_43, %c0_44, %c0_45] : memref<6x24x8xbf16, #tpu.memory_space<vmem>>, vector<1x24x8xbf16>
    %111 = vector.shape_cast %110 : vector<1x24x8xbf16> to vector<24x8xbf16>
    %112 = arith.truncf %109 : vector<8x128xf32> to vector<8x128xbf16>
    %cst_46 = arith.constant dense<0.000000e+00> : vector<24x128xf32>
    %113 = tpu.matmul %111, %112, %cst_46 {dimension_numbers = #tpu.dot_dimension_numbers<[1], [0], [0], [1], [0, 0, 1, 1], [], []>} : vector<24x8xbf16>, vector<8x128xbf16>, vector<24x128xf32> -> vector<24x128xf32>
    %114 = vector.extract_strided_slice %113 {offsets = [0, 0], sizes = [8, 128], strides = [1, 1]} : vector<24x128xf32> to vector<8x128xf32>
    %115 = arith.addf %92, %114 : vector<8x128xf32>
    %116 = vector.extract_strided_slice %113 {offsets = [8, 0], sizes = [16, 128], strides = [1, 1]} : vector<24x128xf32> to vector<16x128xf32>
    %117 = arith.addf %94, %116 : vector<16x128xf32>
    %c4_i32_47 = arith.constant 4 : i32
    %118 = tpu.dynamic_rotate %115 by %c4_i32_47 dim 1 : vector<8x128xf32>, i32 -> vector<8x128xf32>
    %119 = tpu.concatenate %118, %115 in 0 : vector<8x128xf32>, vector<8x128xf32> -> vector<16x128xf32>
    %120 = arith.truncf %119 : vector<16x128xf32> to vector<16x128xbf16>
    %c5 = arith.constant 5 : index
    %c0_48 = arith.constant 0 : index
    %c0_49 = arith.constant 0 : index
    %121 = vector.load %arg3[%c5, %c0_48, %c0_49] : memref<6x16x16xbf16, #tpu.memory_space<vmem>>, vector<1x16x16xbf16>
    %122 = vector.shape_cast %121 : vector<1x16x16xbf16> to vector<16x16xbf16>
    %cst_50 = arith.constant dense<0.000000e+00> : vector<16x128xf32>
    %123 = tpu.matmul %122, %120, %cst_50 {dimension_numbers = #tpu.dot_dimension_numbers<[1], [0], [0], [1], [0, 0, 1, 1], [], []>} : vector<16x16xbf16>, vector<16x128xbf16>, vector<16x128xf32> -> vector<16x128xf32>
    %124 = vector.extract_strided_slice %123 {offsets = [0, 0], sizes = [8, 128], strides = [1, 1]} : vector<16x128xf32> to vector<8x128xf32>
    %125 = math.tanh %124 : vector<8x128xf32>
    %126 = vector.extract_strided_slice %123 {offsets = [8, 0], sizes = [8, 128], strides = [1, 1]} : vector<16x128xf32> to vector<8x128xf32>
    %127 = arith.negf %126 : vector<8x128xf32>
    %128 = math.exp %127 : vector<8x128xf32>
    %cst_51 = arith.constant 1.000000e+00 : f32
    %129 = vector.broadcast %cst_51 : f32 to vector<8x128xf32>
    %130 = arith.addf %129, %128 : vector<8x128xf32>
    %131 = arith.divf %129, %130 : vector<8x128xf32>
    %132 = arith.mulf %125, %131 : vector<8x128xf32>
    %c5_52 = arith.constant 5 : index
    %c0_53 = arith.constant 0 : index
    %c0_54 = arith.constant 0 : index
    %133 = vector.load %arg4[%c5_52, %c0_53, %c0_54] : memref<6x24x8xbf16, #tpu.memory_space<vmem>>, vector<1x24x8xbf16>
    %134 = vector.shape_cast %133 : vector<1x24x8xbf16> to vector<24x8xbf16>
    %135 = arith.truncf %132 : vector<8x128xf32> to vector<8x128xbf16>
    %cst_55 = arith.constant dense<0.000000e+00> : vector<24x128xf32>
    %136 = tpu.matmul %134, %135, %cst_55 {dimension_numbers = #tpu.dot_dimension_numbers<[1], [0], [0], [1], [0, 0, 1, 1], [], []>} : vector<24x8xbf16>, vector<8x128xbf16>, vector<24x128xf32> -> vector<24x128xf32>
    %137 = vector.extract_strided_slice %136 {offsets = [8, 0], sizes = [16, 128], strides = [1, 1]} : vector<24x128xf32> to vector<16x128xf32>
    %138 = arith.addf %117, %137 : vector<16x128xf32>
    %cst_56 = arith.constant 0.000000e+00 : f32
    %139 = vector.broadcast %cst_56 : f32 to vector<16x128xf32>
    %140 = arith.maximumf %138, %139 : vector<16x128xf32>
    %141 = arith.truncf %140 : vector<16x128xf32> to vector<16x128xbf16>
    %c0_57 = arith.constant 0 : index
    %c0_58 = arith.constant 0 : index
    %142 = vector.load %arg5[%c0_57, %c0_58] : memref<16x16xbf16, #tpu.memory_space<vmem>>, vector<16x16xbf16>
    %cst_59 = arith.constant dense<0.000000e+00> : vector<16x128xf32>
    %143 = tpu.matmul %142, %141, %cst_59 {dimension_numbers = #tpu.dot_dimension_numbers<[1], [0], [0], [1], [0, 0, 1, 1], [], []>} : vector<16x16xbf16>, vector<16x128xbf16>, vector<16x128xf32> -> vector<16x128xf32>
    %cst_60 = arith.constant 0.000000e+00 : f32
    %144 = vector.broadcast %cst_60 : f32 to vector<16x128xf32>
    %145 = arith.maximumf %143, %144 : vector<16x128xf32>
    %c0_61 = arith.constant 0 : index
    %c0_62 = arith.constant 0 : index
    %146 = vector.load %arg6[%c0_61, %c0_62] : memref<8x16xbf16, #tpu.memory_space<vmem>>, vector<8x16xbf16>
    %147 = arith.truncf %145 : vector<16x128xf32> to vector<16x128xbf16>
    %cst_63 = arith.constant dense<0.000000e+00> : vector<8x128xf32>
    %148 = tpu.matmul %146, %147, %cst_63 {dimension_numbers = #tpu.dot_dimension_numbers<[1], [0], [0], [1], [0, 0, 1, 1], [], []>} : vector<8x16xbf16>, vector<16x128xbf16>, vector<8x128xf32> -> vector<8x128xf32>
    %c0_64 = arith.constant 0 : index
    %c0_65 = arith.constant 0 : index
    %c0_66 = arith.constant 0 : index
    %149 = vector.load %arg7[%c0_64, %c0_65, %c0_66] : memref<1x8x128xf32, #tpu.memory_space<vmem>>, vector<1x8x128xf32>
    %150 = vector.shape_cast %149 : vector<1x8x128xf32> to vector<8x128xf32>
    %151 = vector.shape_cast %148 : vector<8x128xf32> to vector<1x8x128xf32>
    tpu.vector_store %arg7[%c0_64, %c0_65, %c0_66], %151 {strides = array<i32>} : memref<1x8x128xf32, #tpu.memory_space<vmem>>, vector<1x8x128xf32>,
    return
  }
  func.func @transform_0(%arg0: i32) -> (i32, i32, i32) {
    %c0_i32 = arith.constant 0 : i32
    %c0_i32_0 = arith.constant 0 : i32
    %c0_i32_1 = arith.constant 0 : i32
    return %arg0, %c0_i32, %c0_i32_0 : i32, i32, i32
  }
  func.func @transform_1(%arg0: i32) -> (i32, i32) {
    %c0_i32 = arith.constant 0 : i32
    %c0_i32_0 = arith.constant 0 : i32
    %c0_i32_1 = arith.constant 0 : i32
    return %c0_i32, %c0_i32_0 : i32, i32
  }
  func.func @transform_2(%arg0: i32) -> (i32, i32, i32) {
    %c0_i32 = arith.constant 0 : i32
    %c0_i32_0 = arith.constant 0 : i32
    %c0_i32_1 = arith.constant 0 : i32
    %c0_i32_2 = arith.constant 0 : i32
    return %c0_i32, %c0_i32_0, %c0_i32_1 : i32, i32, i32
  }
  func.func @transform_3(%arg0: i32) -> (i32, i32, i32) {
    %c0_i32 = arith.constant 0 : i32
    %c0_i32_0 = arith.constant 0 : i32
    %c0_i32_1 = arith.constant 0 : i32
    %c0_i32_2 = arith.constant 0 : i32
    return %c0_i32, %c0_i32_0, %c0_i32_1 : i32, i32, i32
  }
  func.func @transform_4(%arg0: i32) -> (i32, i32) {
    %c0_i32 = arith.constant 0 : i32
    %c0_i32_0 = arith.constant 0 : i32
    %c0_i32_1 = arith.constant 0 : i32
    return %c0_i32, %c0_i32_0 : i32, i32
  }
  func.func @transform_5(%arg0: i32) -> (i32, i32) {
    %c0_i32 = arith.constant 0 : i32
    %c0_i32_0 = arith.constant 0 : i32
    %c0_i32_1 = arith.constant 0 : i32
    return %c0_i32, %c0_i32_0 : i32, i32
  }
  func.func @transform_6(%arg0: i32) -> (i32, i32, i32) {
    %c0_i32 = arith.constant 0 : i32
    %c0_i32_0 = arith.constant 0 : i32
    %c0_i32_1 = arith.constant 0 : i32
    return %arg0, %c0_i32, %c0_i32_0 : i32, i32, i32
  }
}

</mosaic_0001>

<llo_original>
// kernel: wavenet_forward.1
$region0: #{wavenet_forward.1}
  #allocation0 [shape = 'u32[]', space=smem, size = 0x4, offset = 0x4, fixed_abs, tag = 'smem constant byte address 0x4 - core index']
  #allocation1 [shape = 'u32[72,128]{1,0:T(1,128)}', space=vmem, size = 0x9000, scoped, tag = 'internal scratch']
  %s0 = inlined_call_operand.vmem [shape: bf16[2,8,128], index: 0, kind: input, shape index: {}]
  %s1 = inlined_call_operand.vmem [shape: bf16[8,8], index: 1, kind: input, shape index: {}]
  %s2 = inlined_call_operand.vmem [shape: bf16[6,16,16], index: 2, kind: input, shape index: {}]
  %s3 = inlined_call_operand.vmem [shape: bf16[6,24,8], index: 3, kind: input, shape index: {}]
  %s4 = inlined_call_operand.vmem [shape: bf16[16,16], index: 4, kind: input, shape index: {}]
  %s5 = inlined_call_operand.vmem [shape: bf16[8,16], index: 5, kind: input, shape index: {}]
  %s6 = inlined_call_operand.vmem [shape: f32[2,8,128], index: 6, kind: output, shape index: {}]
  %s7 = sld [smem:[#allocation0]]
  $region57: #{wavenet_forward.1} parent=0
    _
  %s9 = ssub.s32 1, %s7
  %s10 = scalar_select 0, %s9, %s7
  loop: start=0, step=1, limit=4
  $region2: #{wavenet_forward.1} parent=0 // loop_pre_header
    _
  $region3: #{wavenet_forward.1} parent=0 // loop_header
    %s12 = sphi 0, %s16
    %p13 = scmp.ge.s32.totalorder %s12, 4
    %s22 = sphi 0, %s24
    %s25 = sphi 0, %s22
    %s26 = sphi 0, %s25
    %s42 = sphi 0, %s26
    %s46 = sphi 0, %s46
    %s48 = sphi 0, %s46
    %s49 = sphi 0, %s48
    %s63 = sphi 0, %s49
    %s67 = sphi 0, %s67
    %s69 = sphi 0, %s67
    %s70 = sphi 0, %s69
    %s84 = sphi 0, %s70
    %s88 = sphi 0, %s88
    %s90 = sphi 0, %s88
    %s91 = sphi 0, %s90
    %s105 = sphi 0, %s91
    %s109 = sphi 0, %s109
    %s111 = sphi 0, %s109
    %s112 = sphi 0, %s111
    %s126 = sphi 0, %s112
    %s130 = sphi 0, %s130
    %s132 = sphi 0, %s130
    %s133 = sphi 0, %s132
    %s147 = sphi 0, %s133
    %s153 = sphi 0, %s155
    %s156 = sphi 0, %s153
    %s157 = sphi 0, %s156
    %s173 = sphi 0, %s157
  $region4: #{wavenet_forward.1} parent=0 // loop_header_branch
    %15 = sbr.rel (%p13) target = $region8
  $region5: #{wavenet_forward.1} parent=0 // loop_body
    %s17 = ssub.s32 %s12, 1
    %s18 = ssub.s32 %s12, 2
    %s19 = sadd.s32 %s12, 1
    %s20 = ssub.s32 %s12, %s19
    %p21 = scmp.eq.s32.totalorder %s20, 0
    %s23 = sadd.s32 %s22, 1
    %s24 = scalar_select %p21, %s22, %s23
    %p27 = pneg %p21
    %p28 = scmp.eq.s32.totalorder %s12, 1
    %p29 = por %p27, %p28
    %p30 = scmp.ne.s32.totalorder %s22, %s25
    %p31 = scmp.eq.s32.totalorder %s12, 0
    %p32 = por %p30, %p31
    %p33 = scmp.ne.s32.totalorder %s22, %s25
    %p34 = scmp.eq.s32.totalorder %s17, 1
    %p35 = por %p33, %p34
    %p36 = scmp.ne.s32.totalorder %s25, %s26
    %p37 = scmp.eq.s32.totalorder %s17, 0
    %p38 = por %p36, %p37
    %p39 = scmp.ne.s32.totalorder %s25, %s26
    %p40 = scmp.eq.s32.totalorder %s18, 1
    %p41 = por %p39, %p40
    %p43 = scmp.ne.s32.totalorder %s26, %s42
    %p44 = scmp.eq.s32.totalorder %s18, 0
    %p45 = por %p43, %p44
    %s47 = sadd.s32 %s46, 1
    %p50 = scmp.eq.s32.totalorder %s12, 1
    %p51 = scmp.ne.s32.totalorder %s46, %s48
    %p52 = scmp.eq.s32.totalorder %s12, 0
    %p53 = por %p51, %p52
    %p54 = scmp.ne.s32.totalorder %s46, %s48
    %p55 = scmp.eq.s32.totalorder %s17, 1
    %p56 = por %p54, %p55
    %p57 = scmp.ne.s32.totalorder %s48, %s49
    %p58 = scmp.eq.s32.totalorder %s17, 0
    %p59 = por %p57, %p58
    %p60 = scmp.ne.s32.totalorder %s48, %s49
    %p61 = scmp.eq.s32.totalorder %s18, 1
    %p62 = por %p60, %p61
    %p64 = scmp.ne.s32.totalorder %s49, %s63
    %p65 = scmp.eq.s32.totalorder %s18, 0
    %p66 = por %p64, %p65
    %s68 = sadd.s32 %s67, 1
    %p71 = scmp.eq.s32.totalorder %s12, 1
    %p72 = scmp.ne.s32.totalorder %s67, %s69
    %p73 = scmp.eq.s32.totalorder %s12, 0
    %p74 = por %p72, %p73
    %p75 = scmp.ne.s32.totalorder %s67, %s69
    %p76 = scmp.eq.s32.totalorder %s17, 1
    %p77 = por %p75, %p76
    %p78 = scmp.ne.s32.totalorder %s69, %s70
    %p79 = scmp.eq.s32.totalorder %s17, 0
    %p80 = por %p78, %p79
    %p81 = scmp.ne.s32.totalorder %s69, %s70
    %p82 = scmp.eq.s32.totalorder %s18, 1
    %p83 = por %p81, %p82
    %p85 = scmp.ne.s32.totalorder %s70, %s84
    %p86 = scmp.eq.s32.totalorder %s18, 0
    %p87 = por %p85, %p86
    %s89 = sadd.s32 %s88, 1
    %p92 = scmp.eq.s32.totalorder %s12, 1
    %p93 = scmp.ne.s32.totalorder %s88, %s90
    %p94 = scmp.eq.s32.totalorder %s12, 0
    %p95 = por %p93, %p94
    %p96 = scmp.ne.s32.totalorder %s88, %s90
    %p97 = scmp.eq.s32.totalorder %s17, 1
    %p98 = por %p96, %p97
    %p99 = scmp.ne.s32.totalorder %s90, %s91
    %p100 = scmp.eq.s32.totalorder %s17, 0
    %p101 = por %p99, %p100
    %p102 = scmp.ne.s32.totalorder %s90, %s91
    %p103 = scmp.eq.s32.totalorder %s18, 1
    %p104 = por %p102, %p103
    %p106 = scmp.ne.s32.totalorder %s91, %s105
    %p107 = scmp.eq.s32.totalorder %s18, 0
    %p108 = por %p106, %p107
    %s110 = sadd.s32 %s109, 1
    %p113 = scmp.eq.s32.totalorder %s12, 1
    %p114 = scmp.ne.s32.totalorder %s109, %s111
    %p115 = scmp.eq.s32.totalorder %s12, 0
    %p116 = por %p114, %p115
    %p117 = scmp.ne.s32.totalorder %s109, %s111
    %p118 = scmp.eq.s32.totalorder %s17, 1
    %p119 = por %p117, %p118
    %p120 = scmp.ne.s32.totalorder %s111, %s112
    %p121 = scmp.eq.s32.totalorder %s17, 0
    %p122 = por %p120, %p121
    %p123 = scmp.ne.s32.totalorder %s111, %s112
    %p124 = scmp.eq.s32.totalorder %s18, 1
    %p125 = por %p123, %p124
    %p127 = scmp.ne.s32.totalorder %s112, %s126
    %p128 = scmp.eq.s32.totalorder %s18, 0
    %p129 = por %p127, %p128
    %s131 = sadd.s32 %s130, 1
    %p134 = scmp.eq.s32.totalorder %s12, 1
    %p135 = scmp.ne.s32.totalorder %s130, %s132
    %p136 = scmp.eq.s32.totalorder %s12, 0
    %p137 = por %p135, %p136
    %p138 = scmp.ne.s32.totalorder %s130, %s132
    %p139 = scmp.eq.s32.totalorder %s17, 1
    %p140 = por %p138, %p139
    %p141 = scmp.ne.s32.totalorder %s132, %s133
    %p142 = scmp.eq.s32.totalorder %s17, 0
    %p143 = por %p141, %p142
    %p144 = scmp.ne.s32.totalorder %s132, %s133
    %p145 = scmp.eq.s32.totalorder %s18, 1
    %p146 = por %p144, %p145
    %p148 = scmp.ne.s32.totalorder %s133, %s147
    %p149 = scmp.eq.s32.totalorder %s18, 0
    %p150 = por %p148, %p149
    %s151 = ssub.s32 %s12, %s19
    %p152 = scmp.eq.s32.totalorder %s151, 0
    %s154 = sadd.s32 %s153, 1
    %s155 = scalar_select %p152, %s153, %s154
    %p158 = pneg %p152
    %p159 = scmp.eq.s32.totalorder %s12, 1
    %p160 = por %p158, %p159
    %p161 = scmp.ne.s32.totalorder %s153, %s156
    %p162 = scmp.eq.s32.totalorder %s12, 0
    %p163 = por %p161, %p162
    %p164 = scmp.ne.s32.totalorder %s153, %s156
    %p165 = scmp.eq.s32.totalorder %s17, 1
    %p166 = por %p164, %p165
    %p167 = scmp.ne.s32.totalorder %s156, %s157
    %p168 = scmp.eq.s32.totalorder %s17, 0
    %p169 = por %p167, %p168
    %p170 = scmp.ne.s32.totalorder %s156, %s157
    %p171 = scmp.eq.s32.totalorder %s18, 1
    %p172 = por %p170, %p171
    %p174 = scmp.ne.s32.totalorder %s157, %s173
    %p175 = scmp.eq.s32.totalorder %s18, 0
    %p176 = por %p174, %p175
    %p177 = scmp.le.s32.totalorder 1, %s12
    %p178 = scmp.lt.s32.totalorder %s12, 3
    %p179 = pnand %p177, %p178
    %p180 = pneg %p179
    // Predicated region
    $region9: #{wavenet_forward.1} parent=5 // pred_check
      _
    $region10: #{wavenet_forward.1} parent=5 // pred_check_branch
      %182 = sbr.rel (%p179) target = $region12
    $region11: #{wavenet_forward.1} parent=5 // pred_region
      %s183 = ssub.s32 %s12, 1
      // Predicated region
      $region13: #{wavenet_forward.1} parent=11 // pred_check
        %p184 = pneg %p59
      $region14: #{wavenet_forward.1} parent=11 // pred_check_branch
        %186 = sbr.rel (%p184) target = $region16
      $region15: #{wavenet_forward.1} parent=11 // pred_region
        _
      $region16: #{wavenet_forward.1} parent=11 // pred_fallthru
        _
      // Predicated region
      $region17: #{wavenet_forward.1} parent=11 // pred_check
        %p187 = pneg %p80
      $region18: #{wavenet_forward.1} parent=11 // pred_check_branch
        %189 = sbr.rel (%p187) target = $region20
      $region19: #{wavenet_forward.1} parent=11 // pred_region
        _
      $region20: #{wavenet_forward.1} parent=11 // pred_fallthru
        _
      // Predicated region
      $region21: #{wavenet_forward.1} parent=11 // pred_check
        %p190 = pneg %p101
      $region22: #{wavenet_forward.1} parent=11 // pred_check_branch
        %192 = sbr.rel (%p190) target = $region24
      $region23: #{wavenet_forward.1} parent=11 // pred_region
        _
      $region24: #{wavenet_forward.1} parent=11 // pred_fallthru
        _
      // Predicated region
      $region25: #{wavenet_forward.1} parent=11 // pred_check
        %p193 = pneg %p122
      $region26: #{wavenet_forward.1} parent=11 // pred_check_branch
        %195 = sbr.rel (%p193) target = $region28
      $region27: #{wavenet_forward.1} parent=11 // pred_region
        _
      $region28: #{wavenet_forward.1} parent=11 // pred_fallthru
        _
      // Predicated region
      $region29: #{wavenet_forward.1} parent=11 // pred_check
        %p196 = pneg %p143
      $region30: #{wavenet_forward.1} parent=11 // pred_check_branch
        %198 = sbr.rel (%p196) target = $region32
      $region31: #{wavenet_forward.1} parent=11 // pred_region
        _
      $region32: #{wavenet_forward.1} parent=11 // pred_fallthru
        _
    $region12: #{wavenet_forward.1} parent=5 // pred_fallthru
      _
    %p199 = scmp.lt.s32.totalorder %s12, 2
    // Predicated region
    $region33: #{wavenet_forward.1} parent=5 // pred_check
      %p200 = pneg %p199
    $region34: #{wavenet_forward.1} parent=5 // pred_check_branch
      %202 = sbr.rel (%p200) target = $region36
    $region35: #{wavenet_forward.1} parent=5 // pred_region
      // Predicated region
      $region37: #{wavenet_forward.1} parent=35 // pred_check
        %p203 = pneg %p32
      $region38: #{wavenet_forward.1} parent=35 // pred_check_branch
        %205 = sbr.rel (%p203) target = $region40
      $region39: #{wavenet_forward.1} parent=35 // pred_region
        %p206 = scmp.lt.s32.totalorder %s12, 1
        %s207 = scalar_select %p206, %s12, 1
        %s208 = smul.addr %s207, 4
        %s209 = scalar_lea.vmem %s0, %s208
      $region40: #{wavenet_forward.1} parent=35 // pred_fallthru
        _
    $region36: #{wavenet_forward.1} parent=5 // pred_fallthru
      _
    %p210 = scmp.le.s32.totalorder 1, %s12
    %p211 = scmp.lt.s32.totalorder %s12, 3
    %p212 = pnand %p210, %p211
    %p213 = pneg %p212
    // Predicated region
    $region41: #{wavenet_forward.1} parent=5 // pred_check
      _
    $region42: #{wavenet_forward.1} parent=5 // pred_check_branch
      %215 = sbr.rel (%p212) target = $region44
    $region43: #{wavenet_forward.1} parent=5 // pred_region
      %s216 = ssub.s32 %s12, 1
      %p217 = scmp.lt.s32.totalorder %s17, 1
      %s218 = scalar_select %p217, %s17, 1
      %s219 = smul.addr %s218, 4
      %s220 = scalar_lea.vmem %s0, %s219
      %p221 = pneg %p38
      %p222 = pneg %p35
      %p223 = pneg %p59
      %p224 = pneg %p56
      %p225 = pneg %p80
      %p226 = pneg %p77
      %p227 = pneg %p101
      %p228 = pneg %p98
      %p229 = pneg %p122
      %p230 = pneg %p119
      %p231 = pneg %p143
      %p232 = pneg %p140
      %p233 = pneg %p169
      %p234 = pneg %p166
      %p235 = scmp.lt.s32.totalorder %s17, 1
      %s236 = scalar_select %p235, %s17, 1
      %s237 = smul.addr %s236, 8
      %s238 = scalar_lea.vmem %s6, %s237
      %p239 = scmp.lt.s32.totalorder %s17, 1
      %s240 = scalar_select %p239, %s17, 1
      %s241 = smul.addr %s240, 4
      %s242 = scalar_lea.vmem %s0, %s241
      %p243 = scmp.lt.s32.totalorder %s17, 1
      %s244 = scalar_select %p243, %s17, 1
      %s245 = smul.addr %s244, 8
      %s246 = scalar_lea.vmem %s6, %s245
      %v248 = vld [vmem:[%s1] sm:$0xf]
      %v249 = vld [vmem:[%s242] sm:$0xf]
      %vm250 = vcmask 64512
      %v252 = vsel %vm250, %v248, 0
      %vm254 = vcmask 1043456
      %v256 = vsel %vm254, %v249, 0
      %258 = vmatpush.bf16.msra.mxu0 0
      %259 = vmatpush.bf16.msra.mxu0 0
      %260 = vmatpush.bf16.msra.mxu0 0
      %261 = vmatpush.bf16.msra.mxu0 0
      %262 = vmatpush.bf16.msra.mxu0 0
      %263 = vmatpush.bf16.msra.mxu0 0
      %264 = vmatpush.bf16.msra.mxu0 0
      %265 = vmatpush.bf16.msra.mxu0 %v256
      %266 = vmatmul.bf16.gmra.mxu0 %v252
      %v267 = vpop.f32.mrf.mxu0
      %v268 = vadd.f32 0.0, %v267
      %v269 = vpop.f32.mrf.mxu0
      %270 = vdwg.mxu0
      %271 = vrot.lane.b32.xlu0 %v268, 1
      %v272 = vpop.permute.xlu0 %271
      %v273 = vpack.c.bf16 %v268, %v272
      %v274 = vld [vmem:[%s2] sm:$0xf]
      %v275 = vld [vmem:[%s2 + $0x4] sm:$0xf]
      %v278 = vunpack.c.l.b16 %v274
      %v279 = vunpack.c.l.b16 %v275
      %v280 = vpack.c.b16 %v279, %v278
      %vm281 = vcmask 130048
      %v283 = vsel %vm281, %v280, 0
      %285 = vmatpush.bf16.msra.mxu0 0
      %286 = vmatpush.bf16.msra.mxu0 0
      %287 = vmatpush.bf16.msra.mxu0 0
      %288 = vmatpush.bf16.msra.mxu0 0
      %289 = vmatpush.bf16.msra.mxu0 0
      %290 = vmatpush.bf16.msra.mxu0 0
      %291 = vmatpush.bf16.msra.mxu0 0
      %292 = vmatpush.bf16.msra.mxu0 %v273
      %293 = vmatmul.bf16.gmra.mxu0 %v283
      %v294 = vpop.f32.mrf.mxu0
      %v295 = vadd.f32 0.0, %v294
      %v296 = vpop.f32.mrf.mxu0
      %v297 = vadd.f32 0.0, %v296
      %298 = vdwg.mxu0
      %v299 = vtanh.pop %v295
      %v300 = vxor.u32 %v297, 2147483648
      %v301 = vmul.f32 %v300, 1.442695
      %v302 = vpow.pop %v301
      %v303 = vadd.f32 %v302, 1.0
      %v304 = vrcp.pop %v303
      %v305 = vmul.f32 %v303, %v304
      %v306 = vsub.f32 1.0, %v305
      %v307 = vmul.f32 %v304, %v306
      %v308 = vadd.f32 %v304, %v307
      %vm309 = vweird.f32 %v303
      %vm310 = vweird.f32 %v304
      %vm311 = vmor %vm309, %vm310
      %v312 = vsel %vm311, %v304, %v308
      %v313 = vand.u32 2147483647, %v303
      %vm314 = vcmp.eq.f32.partialorder %v313, 8.507059e+37
      %v315 = vand.u32 %v303, 2147483648
      %v316 = vor.u32 1.1754944e-38, %v315
      %v317 = vsel %vm314, %v316, %v312
      %v318 = vmul.f32 1.0, %v317
      %v319 = vmul.f32 %v299, %v318
      %v320 = vld [vmem:[%s3] sm:$0xf]
      %v321 = vld [vmem:[%s3 + $0x4] sm:$0xf]
      %v322 = vld [vmem:[%s3 + $0x8] sm:$0xf]
      %v323 = vpack.c.bf16 %v319, %v319
      %v327 = vunpack.c.l.b16 %v320
      %v328 = vunpack.c.l.b16 %v321
      %v329 = vunpack.c.l.b16 %v322
      %v330 = vpack.c.b16 %v328, %v327
      %v331 = vpack.c.b16 %v329, %v329
      %v333 = vsel %vm250, %v330, 0
      %v336 = vsel %vm250, %v331, 0
      %v339 = vsel %vm254, %v323, 0
      %341 = vmatpush.bf16.msra.mxu0 0
      %342 = vmatpush.bf16.msra.mxu0 0
      %343 = vmatpush.bf16.msra.mxu0 0
      %344 = vmatpush.bf16.msra.mxu0 0
      %345 = vmatpush.bf16.msra.mxu0 0
      %346 = vmatpush.bf16.msra.mxu0 0
      %347 = vmatpush.bf16.msra.mxu0 0
      %348 = vmatpush.bf16.msra.mxu0 %v339
      %349 = vmatmul.bf16.gmra.mxu0 %v333
      %v350 = vpop.f32.mrf.mxu0
      %v351 = vadd.f32 0.0, %v350
      %v352 = vpop.f32.mrf.mxu0
      %v353 = vadd.f32 0.0, %v352
      %354 = vmatmul.bf16.gmra.mxu0 %v336
      %v355 = vpop.f32.mrf.mxu0
      %v356 = vadd.f32 0.0, %v355
      %v357 = vpop.f32.mrf.mxu0
      %358 = vdwg.mxu0
      %v359 = vadd.f32 %v268, %v351
      %360 = vrot.lane.b32.xlu0 %v359, 2
      %v361 = vpop.permute.xlu0 %360
      %v362 = vpack.c.bf16 %v359, %v361
      %s363 = scalar_lea.vmem %s2, 8
      %v364 = vld [vmem:[%s363] sm:$0xf]
      %v365 = vld [vmem:[%s363 + $0x4] sm:$0xf]
      %v368 = vunpack.c.l.b16 %v364
      %v369 = vunpack.c.l.b16 %v365
      %v370 = vpack.c.b16 %v369, %v368
      %v372 = vsel %vm281, %v370, 0
      %374 = vmatpush.bf16.msra.mxu0 0
      %375 = vmatpush.bf16.msra.mxu0 0
      %376 = vmatpush.bf16.msra.mxu0 0
      %377 = vmatpush.bf16.msra.mxu0 0
      %378 = vmatpush.bf16.msra.mxu0 0
      %379 = vmatpush.bf16.msra.mxu0 0
      %380 = vmatpush.bf16.msra.mxu0 0
      %381 = vmatpush.bf16.msra.mxu0 %v362
      %382 = vmatmul.bf16.gmra.mxu0 %v372
      %v383 = vpop.f32.mrf.mxu0
      %v384 = vadd.f32 0.0, %v383
      %v385 = vpop.f32.mrf.mxu0
      %v386 = vadd.f32 0.0, %v385
      %387 = vdwg.mxu0
      %v388 = vtanh.pop %v384
      %v389 = vxor.u32 %v386, 2147483648
      %v390 = vmul.f32 %v389, 1.442695
      %v391 = vpow.pop %v390
      %v392 = vadd.f32 %v391, 1.0
      %v393 = vrcp.pop %v392
      %v394 = vmul.f32 %v392, %v393
      %v395 = vsub.f32 1.0, %v394
      %v396 = vmul.f32 %v393, %v395
      %v397 = vadd.f32 %v393, %v396
      %vm398 = vweird.f32 %v392
      %vm399 = vweird.f32 %v393
      %vm400 = vmor %vm398, %vm399
      %v401 = vsel %vm400, %v393, %v397
      %v402 = vand.u32 2147483647, %v392
      %vm403 = vcmp.eq.f32.partialorder %v402, 8.507059e+37
      %v404 = vand.u32 %v392, 2147483648
      %v405 = vor.u32 1.1754944e-38, %v404
      %v406 = vsel %vm403, %v405, %v401
      %v407 = vmul.f32 1.0, %v406
      %v408 = vmul.f32 %v388, %v407
      %s409 = scalar_lea.vmem %s3, 12
      %v410 = vld [vmem:[%s409] sm:$0xf]
      %v411 = vld [vmem:[%s409 + $0x4] sm:$0xf]
      %v412 = vld [vmem:[%s409 + $0x8] sm:$0xf]
      %v413 = vpack.c.bf16 %v408, %v408
      %v417 = vunpack.c.l.b16 %v410
      %v418 = vunpack.c.l.b16 %v411
      %v419 = vunpack.c.l.b16 %v412
      %v420 = vpack.c.b16 %v418, %v417
      %v421 = vpack.c.b16 %v419, %v419
      %v423 = vsel %vm250, %v420, 0
      %v426 = vsel %vm250, %v421, 0
      %v429 = vsel %vm254, %v413, 0
      %431 = vmatpush.bf16.msra.mxu0 0
      %432 = vmatpush.bf16.msra.mxu0 0
      %433 = vmatpush.bf16.msra.mxu0 0
      %434 = vmatpush.bf16.msra.mxu0 0
      %435 = vmatpush.bf16.msra.mxu0 0
      %436 = vmatpush.bf16.msra.mxu0 0
      %437 = vmatpush.bf16.msra.mxu0 0
      %438 = vmatpush.bf16.msra.mxu0 %v429
      %439 = vmatmul.bf16.gmra.mxu0 %v423
      %v440 = vpop.f32.mrf.mxu0
      %v441 = vadd.f32 0.0, %v440
      %v442 = vpop.f32.mrf.mxu0
      %v443 = vadd.f32 0.0, %v442
      %444 = vmatmul.bf16.gmra.mxu0 %v426
      %v445 = vpop.f32.mrf.mxu0
      %v446 = vadd.f32 0.0, %v445
      %v447 = vpop.f32.mrf.mxu0
      %448 = vdwg.mxu0
      %v449 = vadd.f32 %v359, %v441
      %v450 = vadd.f32 %v353, %v443
      %v451 = vadd.f32 %v356, %v446
      %452 = vrot.lane.b32.xlu0 %v449, 4
      %v453 = vpop.permute.xlu0 %452
      %v454 = vpack.c.bf16 %v449, %v453
      %s455 = scalar_lea.vmem %s2, 16
      %v456 = vld [vmem:[%s455] sm:$0xf]
      %v457 = vld [vmem:[%s455 + $0x4] sm:$0xf]
      %v460 = vunpack.c.l.b16 %v456
      %v461 = vunpack.c.l.b16 %v457
      %v462 = vpack.c.b16 %v461, %v460
      %v464 = vsel %vm281, %v462, 0
      %466 = vmatpush.bf16.msra.mxu0 0
      %467 = vmatpush.bf16.msra.mxu0 0
      %468 = vmatpush.bf16.msra.mxu0 0
      %469 = vmatpush.bf16.msra.mxu0 0
      %470 = vmatpush.bf16.msra.mxu0 0
      %471 = vmatpush.bf16.msra.mxu0 0
      %472 = vmatpush.bf16.msra.mxu0 0
      %473 = vmatpush.bf16.msra.mxu0 %v454
      %474 = vmatmul.bf16.gmra.mxu0 %v464
      %v475 = vpop.f32.mrf.mxu0
      %v476 = vadd.f32 0.0, %v475
      %v477 = vpop.f32.mrf.mxu0
      %v478 = vadd.f32 0.0, %v477
      %479 = vdwg.mxu0
      %v480 = vtanh.pop %v476
      %v481 = vxor.u32 %v478, 2147483648
      %v482 = vmul.f32 %v481, 1.442695
      %v483 = vpow.pop %v482
      %v484 = vadd.f32 %v483, 1.0
      %v485 = vrcp.pop %v484
      %v486 = vmul.f32 %v484, %v485
      %v487 = vsub.f32 1.0, %v486
      %v488 = vmul.f32 %v485, %v487
      %v489 = vadd.f32 %v485, %v488
      %vm490 = vweird.f32 %v484
      %vm491 = vweird.f32 %v485
      %vm492 = vmor %vm490, %vm491
      %v493 = vsel %vm492, %v485, %v489
      %v494 = vand.u32 2147483647, %v484
      %vm495 = vcmp.eq.f32.partialorder %v494, 8.507059e+37
      %v496 = vand.u32 %v484, 2147483648
      %v497 = vor.u32 1.1754944e-38, %v496
      %v498 = vsel %vm495, %v497, %v493
      %v499 = vmul.f32 1.0, %v498
      %v500 = vmul.f32 %v480, %v499
      %s501 = scalar_lea.vmem %s3, 24
      %v502 = vld [vmem:[%s501] sm:$0xf]
      %v503 = vld [vmem:[%s501 + $0x4] sm:$0xf]
      %v504 = vld [vmem:[%s501 + $0x8] sm:$0xf]
      %v505 = vpack.c.bf16 %v500, %v500
      %v509 = vunpack.c.l.b16 %v502
      %v510 = vunpack.c.l.b16 %v503
      %v511 = vunpack.c.l.b16 %v504
      %v512 = vpack.c.b16 %v510, %v509
      %v513 = vpack.c.b16 %v511, %v511
      %v515 = vsel %vm250, %v512, 0
      %v518 = vsel %vm250, %v513, 0
      %v521 = vsel %vm254, %v505, 0
      %523 = vmatpush.bf16.msra.mxu0 0
      %524 = vmatpush.bf16.msra.mxu0 0
      %525 = vmatpush.bf16.msra.mxu0 0
      %526 = vmatpush.bf16.msra.mxu0 0
      %527 = vmatpush.bf16.msra.mxu0 0
      %528 = vmatpush.bf16.msra.mxu0 0
      %529 = vmatpush.bf16.msra.mxu0 0
      %530 = vmatpush.bf16.msra.mxu0 %v521
      %531 = vmatmul.bf16.gmra.mxu0 %v515
      %v532 = vpop.f32.mrf.mxu0
      %v533 = vadd.f32 0.0, %v532
      %v534 = vpop.f32.mrf.mxu0
      %v535 = vadd.f32 0.0, %v534
      %536 = vmatmul.bf16.gmra.mxu0 %v518
      %v537 = vpop.f32.mrf.mxu0
      %v538 = vadd.f32 0.0, %v537
      %v539 = vpop.f32.mrf.mxu0
      %540 = vdwg.mxu0
      %v541 = vadd.f32 %v449, %v533
      %v542 = vadd.f32 %v450, %v535
      %v543 = vadd.f32 %v451, %v538
      %544 = vrot.lane.b32.xlu0 %v541, 1
      %v545 = vpop.permute.xlu0 %544
      %v546 = vpack.c.bf16 %v541, %v545
      %s547 = scalar_lea.vmem %s2, 24
      %v548 = vld [vmem:[%s547] sm:$0xf]
      %v549 = vld [vmem:[%s547 + $0x4] sm:$0xf]
      %v552 = vunpack.c.l.b16 %v548
      %v553 = vunpack.c.l.b16 %v549
      %v554 = vpack.c.b16 %v553, %v552
      %v556 = vsel %vm281, %v554, 0
      %558 = vmatpush.bf16.msra.mxu0 0
      %559 = vmatpush.bf16.msra.mxu0 0
      %560 = vmatpush.bf16.msra.mxu0 0
      %561 = vmatpush.bf16.msra.mxu0 0
      %562 = vmatpush.bf16.msra.mxu0 0
      %563 = vmatpush.bf16.msra.mxu0 0
      %564 = vmatpush.bf16.msra.mxu0 0
      %565 = vmatpush.bf16.msra.mxu0 %v546
      %566 = vmatmul.bf16.gmra.mxu0 %v556
      %v567 = vpop.f32.mrf.mxu0
      %v568 = vadd.f32 0.0, %v567
      %v569 = vpop.f32.mrf.mxu0
      %v570 = vadd.f32 0.0, %v569
      %571 = vdwg.mxu0
      %v572 = vtanh.pop %v568
      %v573 = vxor.u32 %v570, 2147483648
      %v574 = vmul.f32 %v573, 1.442695
      %v575 = vpow.pop %v574
      %v576 = vadd.f32 %v575, 1.0
      %v577 = vrcp.pop %v576
      %v578 = vmul.f32 %v576, %v577
      %v579 = vsub.f32 1.0, %v578
      %v580 = vmul.f32 %v577, %v579
      %v581 = vadd.f32 %v577, %v580
      %vm582 = vweird.f32 %v576
      %vm583 = vweird.f32 %v577
      %vm584 = vmor %vm582, %vm583
      %v585 = vsel %vm584, %v577, %v581
      %v586 = vand.u32 2147483647, %v576
      %vm587 = vcmp.eq.f32.partialorder %v586, 8.507059e+37
      %v588 = vand.u32 %v576, 2147483648
      %v589 = vor.u32 1.1754944e-38, %v588
      %v590 = vsel %vm587, %v589, %v585
      %v591 = vmul.f32 1.0, %v590
      %v592 = vmul.f32 %v572, %v591
      %s593 = scalar_lea.vmem %s3, 36
      %v594 = vld [vmem:[%s593] sm:$0xf]
      %v595 = vld [vmem:[%s593 + $0x4] sm:$0xf]
      %v596 = vld [vmem:[%s593 + $0x8] sm:$0xf]
      %v597 = vpack.c.bf16 %v592, %v592
      %v601 = vunpack.c.l.b16 %v594
      %v602 = vunpack.c.l.b16 %v595
      %v603 = vunpack.c.l.b16 %v596
      %v604 = vpack.c.b16 %v602, %v601
      %v605 = vpack.c.b16 %v603, %v603
      %v607 = vsel %vm250, %v604, 0
      %v610 = vsel %vm250, %v605, 0
      %v613 = vsel %vm254, %v597, 0
      %615 = vmatpush.bf16.msra.mxu0 0
      %616 = vmatpush.bf16.msra.mxu0 0
      %617 = vmatpush.bf16.msra.mxu0 0
      %618 = vmatpush.bf16.msra.mxu0 0
      %619 = vmatpush.bf16.msra.mxu0 0
      %620 = vmatpush.bf16.msra.mxu0 0
      %621 = vmatpush.bf16.msra.mxu0 0
      %622 = vmatpush.bf16.msra.mxu0 %v613
      %623 = vmatmul.bf16.gmra.mxu0 %v607
      %v624 = vpop.f32.mrf.mxu0
      %v625 = vadd.f32 0.0, %v624
      %v626 = vpop.f32.mrf.mxu0
      %v627 = vadd.f32 0.0, %v626
      %628 = vmatmul.bf16.gmra.mxu0 %v610
      %v629 = vpop.f32.mrf.mxu0
      %v630 = vadd.f32 0.0, %v629
      %v631 = vpop.f32.mrf.mxu0
      %632 = vdwg.mxu0
      %v633 = vadd.f32 %v541, %v625
      %v634 = vadd.f32 %v542, %v627
      %v635 = vadd.f32 %v543, %v630
      %636 = vrot.lane.b32.xlu0 %v633, 2
      %v637 = vpop.permute.xlu0 %636
      %v638 = vpack.c.bf16 %v633, %v637
      %s639 = scalar_lea.vmem %s2, 32
      %v640 = vld [vmem:[%s639] sm:$0xf]
      %v641 = vld [vmem:[%s639 + $0x4] sm:$0xf]
      %v644 = vunpack.c.l.b16 %v640
      %v645 = vunpack.c.l.b16 %v641
      %v646 = vpack.c.b16 %v645, %v644
      %v648 = vsel %vm281, %v646, 0
      %650 = vmatpush.bf16.msra.mxu0 0
      %651 = vmatpush.bf16.msra.mxu0 0
      %652 = vmatpush.bf16.msra.mxu0 0
      %653 = vmatpush.bf16.msra.mxu0 0
      %654 = vmatpush.bf16.msra.mxu0 0
      %655 = vmatpush.bf16.msra.mxu0 0
      %656 = vmatpush.bf16.msra.mxu0 0
      %657 = vmatpush.bf16.msra.mxu0 %v638
      %658 = vmatmul.bf16.gmra.mxu0 %v648
      %v659 = vpop.f32.mrf.mxu0
      %v660 = vadd.f32 0.0, %v659
      %v661 = vpop.f32.mrf.mxu0
      %v662 = vadd.f32 0.0, %v661
      %663 = vdwg.mxu0
      %v664 = vtanh.pop %v660
      %v665 = vxor.u32 %v662, 2147483648
      %v666 = vmul.f32 %v665, 1.442695
      %v667 = vpow.pop %v666
      %v668 = vadd.f32 %v667, 1.0
      %v669 = vrcp.pop %v668
      %v670 = vmul.f32 %v668, %v669
      %v671 = vsub.f32 1.0, %v670
      %v672 = vmul.f32 %v669, %v671
      %v673 = vadd.f32 %v669, %v672
      %vm674 = vweird.f32 %v668
      %vm675 = vweird.f32 %v669
      %vm676 = vmor %vm674, %vm675
      %v677 = vsel %vm676, %v669, %v673
      %v678 = vand.u32 2147483647, %v668
      %vm679 = vcmp.eq.f32.partialorder %v678, 8.507059e+37
      %v680 = vand.u32 %v668, 2147483648
      %v681 = vor.u32 1.1754944e-38, %v680
      %v682 = vsel %vm679, %v681, %v677
      %v683 = vmul.f32 1.0, %v682
      %v684 = vmul.f32 %v664, %v683
      %s685 = scalar_lea.vmem %s3, 48
      %v686 = vld [vmem:[%s685] sm:$0xf]
      %v687 = vld [vmem:[%s685 + $0x4] sm:$0xf]
      %v688 = vld [vmem:[%s685 + $0x8] sm:$0xf]
      %v689 = vpack.c.bf16 %v684, %v684
      %v693 = vunpack.c.l.b16 %v686
      %v694 = vunpack.c.l.b16 %v687
      %v695 = vunpack.c.l.b16 %v688
      %v696 = vpack.c.b16 %v694, %v693
      %v697 = vpack.c.b16 %v695, %v695
      %v699 = vsel %vm250, %v696, 0
      %v702 = vsel %vm250, %v697, 0
      %v705 = vsel %vm254, %v689, 0
      %707 = vmatpush.bf16.msra.mxu0 0
      %708 = vmatpush.bf16.msra.mxu0 0
      %709 = vmatpush.bf16.msra.mxu0 0
      %710 = vmatpush.bf16.msra.mxu0 0
      %711 = vmatpush.bf16.msra.mxu0 0
      %712 = vmatpush.bf16.msra.mxu0 0
      %713 = vmatpush.bf16.msra.mxu0 0
      %714 = vmatpush.bf16.msra.mxu0 %v705
      %715 = vmatmul.bf16.gmra.mxu0 %v699
      %v716 = vpop.f32.mrf.mxu0
      %v717 = vadd.f32 0.0, %v716
      %v718 = vpop.f32.mrf.mxu0
      %v719 = vadd.f32 0.0, %v718
      %720 = vmatmul.bf16.gmra.mxu0 %v702
      %v721 = vpop.f32.mrf.mxu0
      %v722 = vadd.f32 0.0, %v721
      %v723 = vpop.f32.mrf.mxu0
      %724 = vdwg.mxu0
      %v725 = vadd.f32 %v633, %v717
      %v726 = vadd.f32 %v634, %v719
      %v727 = vadd.f32 %v635, %v722
      %728 = vrot.lane.b32.xlu0 %v725, 4
      %v729 = vpop.permute.xlu0 %728
      %v730 = vpack.c.bf16 %v725, %v729
      %s731 = scalar_lea.vmem %s2, 40
      %v732 = vld [vmem:[%s731] sm:$0xf]
      %v733 = vld [vmem:[%s731 + $0x4] sm:$0xf]
      %v736 = vunpack.c.l.b16 %v732
      %v737 = vunpack.c.l.b16 %v733
      %v738 = vpack.c.b16 %v737, %v736
      %v740 = vsel %vm281, %v738, 0
      %742 = vmatpush.bf16.msra.mxu0 0
      %743 = vmatpush.bf16.msra.mxu0 0
      %744 = vmatpush.bf16.msra.mxu0 0
      %745 = vmatpush.bf16.msra.mxu0 0
      %746 = vmatpush.bf16.msra.mxu0 0
      %747 = vmatpush.bf16.msra.mxu0 0
      %748 = vmatpush.bf16.msra.mxu0 0
      %749 = vmatpush.bf16.msra.mxu0 %v730
      %750 = vmatmul.bf16.gmra.mxu0 %v740
      %v751 = vpop.f32.mrf.mxu0
      %v752 = vadd.f32 0.0, %v751
      %v753 = vpop.f32.mrf.mxu0
      %v754 = vadd.f32 0.0, %v753
      %755 = vdwg.mxu0
      %v756 = vtanh.pop %v752
      %v757 = vxor.u32 %v754, 2147483648
      %v758 = vmul.f32 %v757, 1.442695
      %v759 = vpow.pop %v758
      %v760 = vadd.f32 %v759, 1.0
      %v761 = vrcp.pop %v760
      %v762 = vmul.f32 %v760, %v761
      %v763 = vsub.f32 1.0, %v762
      %v764 = vmul.f32 %v761, %v763
      %v765 = vadd.f32 %v761, %v764
      %vm766 = vweird.f32 %v760
      %vm767 = vweird.f32 %v761
      %vm768 = vmor %vm766, %vm767
      %v769 = vsel %vm768, %v761, %v765
      %v770 = vand.u32 2147483647, %v760
      %vm771 = vcmp.eq.f32.partialorder %v770, 8.507059e+37
      %v772 = vand.u32 %v760, 2147483648
      %v773 = vor.u32 1.1754944e-38, %v772
      %v774 = vsel %vm771, %v773, %v769
      %v775 = vmul.f32 1.0, %v774
      %v776 = vmul.f32 %v756, %v775
      %s777 = scalar_lea.vmem %s3, 60
      %v778 = vld [vmem:[%s777] sm:$0xf]
      %v779 = vld [vmem:[%s777 + $0x4] sm:$0xf]
      %v780 = vld [vmem:[%s777 + $0x8] sm:$0xf]
      %v781 = vpack.c.bf16 %v776, %v776
      %v785 = vunpack.c.l.b16 %v778
      %v786 = vunpack.c.l.b16 %v779
      %v787 = vunpack.c.l.b16 %v780
      %v788 = vpack.c.b16 %v786, %v785
      %v789 = vpack.c.b16 %v787, %v787
      %v791 = vsel %vm250, %v788, 0
      %v794 = vsel %vm250, %v789, 0
      %v797 = vsel %vm254, %v781, 0
      %799 = vmatpush.bf16.msra.mxu0 0
      %800 = vmatpush.bf16.msra.mxu0 0
      %801 = vmatpush.bf16.msra.mxu0 0
      %802 = vmatpush.bf16.msra.mxu0 0
      %803 = vmatpush.bf16.msra.mxu0 0
      %804 = vmatpush.bf16.msra.mxu0 0
      %805 = vmatpush.bf16.msra.mxu0 0
      %806 = vmatpush.bf16.msra.mxu0 %v797
      %807 = vmatmul.bf16.gmra.mxu0 %v791
      %v808 = vpop.f32.mrf.mxu0
      %v809 = vpop.f32.mrf.mxu0
      %v810 = vadd.f32 0.0, %v809
      %811 = vmatmul.bf16.gmra.mxu0 %v794
      %v812 = vpop.f32.mrf.mxu0
      %v813 = vadd.f32 0.0, %v812
      %v814 = vpop.f32.mrf.mxu0
      %815 = vdwg.mxu0
      %v816 = vadd.f32 %v726, %v810
      %v817 = vadd.f32 %v727, %v813
      %v818 = vmax.f32 %v816, 0.0
      %v819 = vmax.f32 %v817, 0.0
      %v820 = vpack.c.bf16 %v819, %v818
      %v821 = vld [vmem:[%s4] sm:$0xf]
      %v822 = vld [vmem:[%s4 + $0x4] sm:$0xf]
      %v825 = vunpack.c.l.b16 %v821
      %v826 = vunpack.c.l.b16 %v822
      %v827 = vpack.c.b16 %v826, %v825
      %v829 = vsel %vm281, %v827, 0
      %831 = vmatpush.bf16.msra.mxu0 0
      %832 = vmatpush.bf16.msra.mxu0 0
      %833 = vmatpush.bf16.msra.mxu0 0
      %834 = vmatpush.bf16.msra.mxu0 0
      %835 = vmatpush.bf16.msra.mxu0 0
      %836 = vmatpush.bf16.msra.mxu0 0
      %837 = vmatpush.bf16.msra.mxu0 0
      %838 = vmatpush.bf16.msra.mxu0 %v820
      %839 = vmatmul.bf16.gmra.mxu0 %v829
      %v840 = vpop.f32.mrf.mxu0
      %v841 = vadd.f32 0.0, %v840
      %v842 = vpop.f32.mrf.mxu0
      %v843 = vadd.f32 0.0, %v842
      %844 = vdwg.mxu0
      %v845 = vmax.f32 %v841, 0.0
      %v846 = vmax.f32 %v843, 0.0
      %v847 = vld [vmem:[%s5] sm:$0xf]
      %v848 = vpack.c.bf16 %v846, %v845
      %v850 = vsel %vm281, %v847, 0
      %852 = vmatpush.bf16.msra.mxu0 0
      %853 = vmatpush.bf16.msra.mxu0 0
      %854 = vmatpush.bf16.msra.mxu0 0
      %855 = vmatpush.bf16.msra.mxu0 0
      %856 = vmatpush.bf16.msra.mxu0 0
      %857 = vmatpush.bf16.msra.mxu0 0
      %858 = vmatpush.bf16.msra.mxu0 0
      %859 = vmatpush.bf16.msra.mxu0 %v848
      %860 = vmatmul.bf16.gmra.mxu0 %v850
      %v861 = vpop.f32.mrf.mxu0
      %v862 = vadd.f32 0.0, %v861
      %v863 = vpop.f32.mrf.mxu0
      %864 = vdwg.mxu0
      %865 = vst [vmem:[%s246] sm:$0xff] %v862
      %p866 = scmp.lt.s32.totalorder %s17, 1
      %s867 = scalar_select %p866, %s17, 1
      %s868 = smul.addr %s867, 8
      %s869 = scalar_lea.vmem %s6, %s868
      // Predicated region
      $region45: #{wavenet_forward.1} parent=43 // pred_check
        %p870 = pneg %p166
      $region46: #{wavenet_forward.1} parent=43 // pred_check_branch
        %872 = sbr.rel (%p870) target = $region48
      $region47: #{wavenet_forward.1} parent=43 // pred_region
        _
      $region48: #{wavenet_forward.1} parent=43 // pred_fallthru
        _
    $region44: #{wavenet_forward.1} parent=5 // pred_fallthru
      _
    %p873 = scmp.le.s32.totalorder 2, %s12
    // Predicated region
    $region49: #{wavenet_forward.1} parent=5 // pred_check
      %p874 = pneg %p873
    $region50: #{wavenet_forward.1} parent=5 // pred_check_branch
      %876 = sbr.rel (%p874) target = $region52
    $region51: #{wavenet_forward.1} parent=5 // pred_region
      %s877 = ssub.s32 %s12, 2
      // Predicated region
      $region53: #{wavenet_forward.1} parent=51 // pred_check
        %p878 = pneg %p172
      $region54: #{wavenet_forward.1} parent=51 // pred_check_branch
        %880 = sbr.rel (%p878) target = $region56
      $region55: #{wavenet_forward.1} parent=51 // pred_region
        %p881 = scmp.lt.s32.totalorder %s18, 1
        %s882 = scalar_select %p881, %s18, 1
        %s883 = smul.addr %s882, 8
        %s884 = scalar_lea.vmem %s6, %s883
      $region56: #{wavenet_forward.1} parent=51 // pred_fallthru
        _
    $region52: #{wavenet_forward.1} parent=5 // pred_fallthru
      _
  $region6: #{wavenet_forward.1} parent=0 // loop_footer
    %s16 = sadd.s32 1, %s12
  $region7: #{wavenet_forward.1} parent=0 // loop_footer_branch
    %11 = sbr.rel target = $region3
  $region8: #{wavenet_forward.1} parent=0 // loop_exit
    _

</llo_original>
